<compile_context>
chip_gen: v6e
topology: v6e:2x2x1
jax: 0.10.0
libtpu: 0.0.40
codegen_flags: <defaults>
</compile_context>

<pallas_src>
import functools

import jax
import jax.numpy as jnp
from jax import lax
from jax.experimental import pallas as pl
from jax.experimental.pallas import tpu as pltpu


LOG_STD_MIN = -20.0
LOG_STD_MAX = 2.0
DEFAULT_TILE_B = 512


def _actor_kernel(state_ref, w1_ref, w2_ref, w3_ref, wh_ref, b_ref, out_ref,
                  *, h1, h2, a2, log_std_min, log_std_max):
    x = state_ref[...]

    # linear1 + relu
    h = jnp.dot(x, w1_ref[...], preferred_element_type=jnp.float32) + b_ref[0:1, :h1]
    h = jnp.maximum(h, 0.0)

    # linear2 + relu
    h = jnp.dot(h, w2_ref[...], preferred_element_type=jnp.float32) + b_ref[1:2, :h1]
    h = jnp.maximum(h, 0.0)

    # linear3 + relu
    h = jnp.dot(h, w3_ref[...], preferred_element_type=jnp.float32) + b_ref[2:3, :h2]
    h = jnp.maximum(h, 0.0)

    # fused mean / log_std head: one (tile, H2) @ (H2, 2*A) matmul
    out = jnp.dot(h, wh_ref[...], preferred_element_type=jnp.float32) + b_ref[3:4, :a2]

    # clamp only the log_std half (lanes >= num_actions), pure VPU work
    num_actions = a2 // 2
    lane = lax.broadcasted_iota(jnp.int32, out.shape, dimension=1)
    clamped = jnp.clip(out, log_std_min, log_std_max)
    out = jnp.where(lane >= num_actions, clamped, out)

    out_ref[...] = out.astype(out_ref.dtype)


def prepare_actor_params(params):
    """One-time packing of PyTorch-convention params into kernel layout.

    Weights (out, in) -> (in, out); mean/log_std head weights concatenated
    along the output dim; all biases packed into one (4, max_width) array.
    Call once at param-load time, NOT per forward step.
    """
    def wt(w):
        return jnp.asarray(w, jnp.float32).T

    w1 = wt(params["w1"])
    w2 = wt(params["w2"])
    w3 = wt(params["w3"])
    w_head = jnp.concatenate([wt(params["mean_w"]), wt(params["log_std_w"])], axis=1)

    h1 = w1.shape[1]
    h2 = w3.shape[1]
    a2 = w_head.shape[1]
    width = max(h1, h2, a2)

    def pad_row(b):
        b = jnp.asarray(b, jnp.float32).reshape(1, -1)
        return jnp.pad(b, ((0, 0), (0, width - b.shape[1])))

    b_head = jnp.concatenate([jnp.asarray(params["mean_b"], jnp.float32),
                              jnp.asarray(params["log_std_b"], jnp.float32)])
    b_packed = jnp.concatenate(
        [pad_row(params["b1"]), pad_row(params["b2"]),
         pad_row(params["b3"]), pad_row(b_head)], axis=0)

    return {"w1": w1, "w2": w2, "w3": w3, "w_head": w_head, "b_packed": b_packed}


def actor_forward(state, packed_params,
                  log_std_min=LOG_STD_MIN, log_std_max=LOG_STD_MAX,
                  tile_b=DEFAULT_TILE_B):
    """state: (B, num_inputs) f32. packed_params: output of prepare_actor_params.

    Returns (mean, log_std), each (B, num_actions) f32.
    """
    state = jnp.asarray(state, jnp.float32)
    B, num_inputs = state.shape

    w1 = packed_params["w1"]
    w2 = packed_params["w2"]
    w3 = packed_params["w3"]
    wh = packed_params["w_head"]
    bp = packed_params["b_packed"]

    h1 = w1.shape[1]
    h2 = w3.shape[1]
    a2 = wh.shape[1]
    num_actions = a2 // 2

    # Batch tiling: one block if small, else tile_b-sized tiles (padded).
    if B <= tile_b:
        tile = B
        b_pad = B
    else:
        tile = tile_b
        b_pad = -(-B // tile) * tile
    if b_pad != B:
        state = jnp.pad(state, ((0, b_pad - B), (0, 0)))

    grid = (b_pad // tile,)

    kernel = functools.partial(
        _actor_kernel, h1=h1, h2=h2, a2=a2,
        log_std_min=float(log_std_min), log_std_max=float(log_std_max))

    def resident(shape):
        # Weights/biases: constant block index -> stay VMEM-resident across grid.
        return pl.BlockSpec(shape, lambda i: (0, 0))

    out = pl.pallas_call(
        kernel,
        out_shape=jax.ShapeDtypeStruct((b_pad, a2), jnp.float32),
        grid=grid,
        in_specs=[
            pl.BlockSpec((tile, num_inputs), lambda i: (i, 0)),
            resident(w1.shape),
            resident(w2.shape),
            resident(w3.shape),
            resident(wh.shape),
            resident(bp.shape),
        ],
        out_specs=pl.BlockSpec((tile, a2), lambda i: (i, 0)),
        compiler_params=pltpu.CompilerParams(
            dimension_semantics=("parallel",)),
    )(state, w1, w2, w3, wh, bp)

    out = out[:B]
    mean = out[:, :num_actions]
    log_std = out[:, num_actions:]
    return mean, log_std


def init_actor_params(key, num_inputs, num_actions, hidden_dim=(64, 48),
                      init_w=0.003):
    """Deterministic init mimicking nn.Linear defaults + the explicit
    uniform(-init_w, init_w) init for the mean / log_std heads."""
    keys = jax.random.split(key, 10)

    def linear_init(kw, kb, fan_in, fan_out):
        bound = 1.0 / jnp.sqrt(float(fan_in))
        w = jax.random.uniform(kw, (fan_out, fan_in), jnp.float32, -bound, bound)
        b = jax.random.uniform(kb, (fan_out,), jnp.float32, -bound, bound)
        return w, b

    def head_init(kw, kb, fan_in, fan_out):
        w = jax.random.uniform(kw, (fan_out, fan_in), jnp.float32, -init_w, init_w)
        b = jax.random.uniform(kb, (fan_out,), jnp.float32, -init_w, init_w)
        return w, b

    w1, b1 = linear_init(keys[0], keys[1], num_inputs, hidden_dim[0])
    w2, b2 = linear_init(keys[2], keys[3], hidden_dim[0], hidden_dim[0])
    w3, b3 = linear_init(keys[4], keys[5], hidden_dim[0], hidden_dim[1])
    mw, mb = head_init(keys[6], keys[7], hidden_dim[1], num_actions)
    sw, sb = head_init(keys[8], keys[9], hidden_dim[1], num_actions)

    return {
        "w1": w1, "b1": b1,
        "w2": w2, "b2": b2,
        "w3": w3, "b3": b3,
        "mean_w": mw, "mean_b": mb,
        "log_std_w": sw, "log_std_b": sb,
    }


def _reference_forward(state, params):
    def lin(x, w, b):
        return x @ jnp.asarray(w).T + jnp.asarray(b)

    h = jax.nn.relu(lin(state, params["w1"], params["b1"]))
    h = jax.nn.relu(lin(h, params["w2"], params["b2"]))
    h = jax.nn.relu(lin(h, params["w3"], params["b3"]))
    mean = lin(h, params["mean_w"], params["mean_b"])
    log_std = jnp.clip(lin(h, params["log_std_w"], params["log_std_b"]),
                       LOG_STD_MIN, LOG_STD_MAX)
    return mean, log_std


if __name__ == "__main__":
    key = jax.random.PRNGKey(0)
    k_param, k_state1, k_state2 = jax.random.split(key, 3)

    num_inputs = 32
    num_actions = 4
    hidden_dim = (64, 48)

    params = init_actor_params(k_param, num_inputs, num_actions, hidden_dim)
    packed = prepare_actor_params(params)  # one-time packing (hot path excluded)

    # Test 1: small batch, single block.
    batch = 8
    state = jax.random.normal(k_state1, (batch, num_inputs), jnp.float32)
    mean, log_std = actor_forward(state, packed)
    jax.block_until_ready((mean, log_std))
    ref_mean, ref_log_std = _reference_forward(state, params)
    assert mean.shape == (batch, num_actions)
    assert log_std.shape == (batch, num_actions)
    assert jnp.allclose(mean, ref_mean, atol=1e-5, rtol=1e-5)
    assert jnp.allclose(log_std, ref_log_std, atol=1e-5, rtol=1e-5)

    # Test 2: exercise the batch grid + padding path (tiny tile for test only).
    batch2 = 13
    state2 = jax.random.normal(k_state2, (batch2, num_inputs), jnp.float32)
    mean2, log_std2 = actor_forward(state2, packed, tile_b=8)
    jax.block_until_ready((mean2, log_std2))
    ref_mean2, ref_log_std2 = _reference_forward(state2, params)
    assert mean2.shape == (batch2, num_actions)
    assert log_std2.shape == (batch2, num_actions)
    assert jnp.allclose(mean2, ref_mean2, atol=1e-5, rtol=1e-5)
    assert jnp.allclose(log_std2, ref_log_std2, atol=1e-5, rtol=1e-5)

    # TODO(synk): Actor.sample() (rsample + tanh squash + log_prob) involves
    # Normal sampling / action-space scaling; only the deterministic forward()
    # hot path is implemented in the kernel.
    print("KERNEL_OK")
</pallas_src>

<mosaic_0001>
module attributes {stable_mosaic.version = 11 : i64} {
  func.func @_actor_kernel(%arg0: i32, %arg1: memref<8x32xf32, #tpu.memory_space<vmem>>, %arg2: memref<32x64xf32, #tpu.memory_space<vmem>>, %arg3: memref<64x64xf32, #tpu.memory_space<vmem>>, %arg4: memref<64x48xf32, #tpu.memory_space<vmem>>, %arg5: memref<48x8xf32, #tpu.memory_space<vmem>>, %arg6: memref<4x64xf32, #tpu.memory_space<vmem>>, %arg7: memref<8x8xf32, #tpu.memory_space<vmem>>) attributes {dimension_semantics = [#tpu.dimension_semantics<parallel>], iteration_bounds = array<i64: 1>, scalar_prefetch = 0 : i64, scratch_operands = 0 : i64, tpu.core_type = #tpu.core_type<tc>, window_params = [{transform_indices = @transform_0, window_bounds = array<i64: 8, 32>}, {pipeline_mode = #tpu.pipeline_mode<synchronous>, transform_indices = @transform_1, window_bounds = array<i64: 32, 64>}, {pipeline_mode = #tpu.pipeline_mode<synchronous>, transform_indices = @transform_2, window_bounds = array<i64: 64, 64>}, {pipeline_mode = #tpu.pipeline_mode<synchronous>, transform_indices = @transform_3, window_bounds = array<i64: 64, 48>}, {pipeline_mode = #tpu.pipeline_mode<synchronous>, transform_indices = @transform_4, window_bounds = array<i64: 48, 8>}, {pipeline_mode = #tpu.pipeline_mode<synchronous>, transform_indices = @transform_5, window_bounds = array<i64: 4, 64>}, {transform_indices = @transform_6, window_bounds = array<i64: 8, 8>}]} {
    %c0 = arith.constant 0 : index
    %c0_0 = arith.constant 0 : index
    %0 = vector.load %arg1[%c0, %c0_0] : memref<8x32xf32, #tpu.memory_space<vmem>>, vector<8x32xf32>
    %c0_1 = arith.constant 0 : index
    %c0_2 = arith.constant 0 : index
    %1 = vector.load %arg2[%c0_1, %c0_2] : memref<32x64xf32, #tpu.memory_space<vmem>>, vector<32x64xf32>
    %cst = arith.constant dense<0.000000e+00> : vector<8x64xf32>
    %2 = tpu.matmul %0, %1, %cst {dimension_numbers = #tpu.dot_dimension_numbers<[1], [0], [0], [1], [0, 0, 1, 1], [], []>} : vector<8x32xf32>, vector<32x64xf32>, vector<8x64xf32> -> vector<8x64xf32>
    %c0_3 = arith.constant 0 : index
    %c0_4 = arith.constant 0 : index
    %3 = vector.load %arg6[%c0_3, %c0_4] : memref<4x64xf32, #tpu.memory_space<vmem>>, vector<1x64xf32>
    %4 = vector.broadcast %3 : vector<1x64xf32> to vector<8x64xf32>
    %5 = arith.addf %2, %4 : vector<8x64xf32>
    %cst_5 = arith.constant 0.000000e+00 : f32
    %6 = vector.broadcast %cst_5 : f32 to vector<8x64xf32>
    %7 = arith.maximumf %5, %6 : vector<8x64xf32>
    %c0_6 = arith.constant 0 : index
    %c0_7 = arith.constant 0 : index
    %8 = vector.load %arg3[%c0_6, %c0_7] : memref<64x64xf32, #tpu.memory_space<vmem>>, vector<64x64xf32>
    %cst_8 = arith.constant dense<0.000000e+00> : vector<8x64xf32>
    %9 = tpu.matmul %7, %8, %cst_8 {dimension_numbers = #tpu.dot_dimension_numbers<[1], [0], [0], [1], [0, 0, 1, 1], [], []>} : vector<8x64xf32>, vector<64x64xf32>, vector<8x64xf32> -> vector<8x64xf32>
    %c1 = arith.constant 1 : index
    %c0_9 = arith.constant 0 : index
    %10 = vector.load %arg6[%c1, %c0_9] : memref<4x64xf32, #tpu.memory_space<vmem>>, vector<1x64xf32>
    %11 = vector.broadcast %10 : vector<1x64xf32> to vector<8x64xf32>
    %12 = arith.addf %9, %11 : vector<8x64xf32>
    %cst_10 = arith.constant 0.000000e+00 : f32
    %13 = vector.broadcast %cst_10 : f32 to vector<8x64xf32>
    %14 = arith.maximumf %12, %13 : vector<8x64xf32>
    %c0_11 = arith.constant 0 : index
    %c0_12 = arith.constant 0 : index
    %15 = vector.load %arg4[%c0_11, %c0_12] : memref<64x48xf32, #tpu.memory_space<vmem>>, vector<64x48xf32>
    %cst_13 = arith.constant dense<0.000000e+00> : vector<8x48xf32>
    %16 = tpu.matmul %14, %15, %cst_13 {dimension_numbers = #tpu.dot_dimension_numbers<[1], [0], [0], [1], [0, 0, 1, 1], [], []>} : vector<8x64xf32>, vector<64x48xf32>, vector<8x48xf32> -> vector<8x48xf32>
    %c2 = arith.constant 2 : index
    %c0_14 = arith.constant 0 : index
    %17 = vector.load %arg6[%c2, %c0_14] : memref<4x64xf32, #tpu.memory_space<vmem>>, vector<1x48xf32>
    %18 = vector.broadcast %17 : vector<1x48xf32> to vector<8x48xf32>
    %19 = arith.addf %16, %18 : vector<8x48xf32>
    %cst_15 = arith.constant 0.000000e+00 : f32
    %20 = vector.broadcast %cst_15 : f32 to vector<8x48xf32>
    %21 = arith.maximumf %19, %20 : vector<8x48xf32>
    %c0_16 = arith.constant 0 : index
    %c0_17 = arith.constant 0 : index
    %22 = vector.load %arg5[%c0_16, %c0_17] : memref<48x8xf32, #tpu.memory_space<vmem>>, vector<48x8xf32>
    %cst_18 = arith.constant dense<0.000000e+00> : vector<8x8xf32>
    %23 = tpu.matmul %21, %22, %cst_18 {dimension_numbers = #tpu.dot_dimension_numbers<[1], [0], [0], [1], [0, 0, 1, 1], [], []>} : vector<8x48xf32>, vector<48x8xf32>, vector<8x8xf32> -> vector<8x8xf32>
    %c3 = arith.constant 3 : index
    %c0_19 = arith.constant 0 : index
    %24 = vector.load %arg6[%c3, %c0_19] : memref<4x64xf32, #tpu.memory_space<vmem>>, vector<1x8xf32>
    %25 = vector.broadcast %24 : vector<1x8xf32> to vector<8x8xf32>
    %26 = arith.addf %23, %25 : vector<8x8xf32>
    %27 = tpu.iota {dimensions = array<i32: 1>} : vector<8x8xi32>
    %cst_20 = arith.constant -2.000000e+01 : f32
    %cst_21 = arith.constant 2.000000e+00 : f32
    %28 = vector.broadcast %cst_20 : f32 to vector<8x8xf32>
    %29 = arith.maximumf %28, %26 : vector<8x8xf32>
    %30 = vector.broadcast %cst_21 : f32 to vector<8x8xf32>
    %31 = arith.minimumf %30, %29 : vector<8x8xf32>
    %c4_i32 = arith.constant 4 : i32
    %32 = vector.broadcast %c4_i32 : i32 to vector<8x8xi32>
    %33 = arith.cmpi sge, %27, %32 : vector<8x8xi32>
    %34 = arith.select %33, %31, %26 : vector<8x8xi1>, vector<8x8xf32>
    %c0_22 = arith.constant 0 : index
    %c0_23 = arith.constant 0 : index
    %35 = vector.load %arg7[%c0_22, %c0_23] : memref<8x8xf32, #tpu.memory_space<vmem>>, vector<8x8xf32>
    tpu.vector_store %arg7[%c0_22, %c0_23], %34 {strides = array<i32>} : memref<8x8xf32, #tpu.memory_space<vmem>>, vector<8x8xf32>,
    return
  }
  func.func @transform_0(%arg0: i32) -> (i32, i32) {
    %c0_i32 = arith.constant 0 : i32
    %c0_i32_0 = arith.constant 0 : i32
    return %arg0, %c0_i32 : i32, i32
  }
  func.func @transform_1(%arg0: i32) -> (i32, i32) {
    %c0_i32 = arith.constant 0 : i32
    %c0_i32_0 = arith.constant 0 : i32
    %c0_i32_1 = arith.constant 0 : i32
    return %c0_i32, %c0_i32_0 : i32, i32
  }
  func.func @transform_2(%arg0: i32) -> (i32, i32) {
    %c0_i32 = arith.constant 0 : i32
    %c0_i32_0 = arith.constant 0 : i32
    %c0_i32_1 = arith.constant 0 : i32
    return %c0_i32, %c0_i32_0 : i32, i32
  }
  func.func @transform_3(%arg0: i32) -> (i32, i32) {
    %c0_i32 = arith.constant 0 : i32
    %c0_i32_0 = arith.constant 0 : i32
    %c0_i32_1 = arith.constant 0 : i32
    return %c0_i32, %c0_i32_0 : i32, i32
  }
  func.func @transform_4(%arg0: i32) -> (i32, i32) {
    %c0_i32 = arith.constant 0 : i32
    %c0_i32_0 = arith.constant 0 : i32
    %c0_i32_1 = arith.constant 0 : i32
    return %c0_i32, %c0_i32_0 : i32, i32
  }
  func.func @transform_5(%arg0: i32) -> (i32, i32) {
    %c0_i32 = arith.constant 0 : i32
    %c0_i32_0 = arith.constant 0 : i32
    %c0_i32_1 = arith.constant 0 : i32
    return %c0_i32, %c0_i32_0 : i32, i32
  }
  func.func @transform_6(%arg0: i32) -> (i32, i32) {
    %c0_i32 = arith.constant 0 : i32
    %c0_i32_0 = arith.constant 0 : i32
    return %arg0, %c0_i32 : i32, i32
  }
}

</mosaic_0001>

<llo_original>
// kernel: tpu_custom_call.1
$region0: #{tpu_custom_call.1}
  #allocation0 [shape = 'u32[]', space=smem, size = 0x4, offset = 0x4, fixed_abs, tag = 'smem constant byte address 0x4 - core index']
  #allocation1 [shape = 'u32[144,128]{1,0:T(1,128)}', space=vmem, size = 0x12000, scoped, tag = 'internal scratch']
  %s0 = inlined_call_operand.vmem [shape: f32[8,32], index: 0, kind: input, shape index: {}]
  %s1 = inlined_call_operand.vmem [shape: f32[32,64], index: 1, kind: input, shape index: {}]
  %s2 = inlined_call_operand.vmem [shape: f32[64,64], index: 2, kind: input, shape index: {}]
  %s3 = inlined_call_operand.vmem [shape: f32[64,48], index: 3, kind: input, shape index: {}]
  %s4 = inlined_call_operand.vmem [shape: f32[48,8], index: 4, kind: input, shape index: {}]
  %s5 = inlined_call_operand.vmem [shape: f32[4,64], index: 5, kind: input, shape index: {}]
  %s6 = inlined_call_operand.hbm [shape: f32[8,8], index: 6, kind: output, shape index: {}]
  %s7 = sld [smem:[#allocation0]]
  $region34: #{tpu_custom_call.1} parent=0
    _
  %s9 = ssub.s32 1, %s7
  %s10 = scalar_select 0, %s9, %s7
  $region1: #{tpu_custom_call.1} parent=0
    #allocation2 [shape = 'u8[4096]{0}', space=vmem, size = 0x1000, scoped, tag = 'output window, operand 0, single buffered']
    #allocation3 [shape = 's32[1]{0}', space=sflag, size = 0x4, scoped, tag = 'scoped memory for tpu_custom_call.1']
    %11 = vsyncpa [#allocation3], 0
    // Predicated region
    $region2: #{tpu_custom_call.1} parent=1 // pred_check
      _
    $region3: #{tpu_custom_call.1} parent=1 // pred_check_branch
      %13 = sbr.rel (0) target = $region5
    $region4: #{tpu_custom_call.1} parent=1 // pred_region
      _
    $region5: #{tpu_custom_call.1} parent=1 // pred_fallthru
      _
    // Predicated region
    $region6: #{tpu_custom_call.1} parent=1 // pred_check
      _
    $region7: #{tpu_custom_call.1} parent=1 // pred_check_branch
      %15 = sbr.rel (0) target = $region9
    $region8: #{tpu_custom_call.1} parent=1 // pred_region
      _
    $region9: #{tpu_custom_call.1} parent=1 // pred_fallthru
      _
    // Predicated region
    $region10: #{tpu_custom_call.1} parent=1 // pred_check
      _
    $region11: #{tpu_custom_call.1} parent=1 // pred_check_branch
      %17 = sbr.rel (0) target = $region13
    $region12: #{tpu_custom_call.1} parent=1 // pred_region
      _
    $region13: #{tpu_custom_call.1} parent=1 // pred_fallthru
      _
    // Predicated region
    $region14: #{tpu_custom_call.1} parent=1 // pred_check
      _
    $region15: #{tpu_custom_call.1} parent=1 // pred_check_branch
      %19 = sbr.rel (0) target = $region17
    $region16: #{tpu_custom_call.1} parent=1 // pred_region
      _
    $region17: #{tpu_custom_call.1} parent=1 // pred_fallthru
      _
    // Predicated region
    $region18: #{tpu_custom_call.1} parent=1 // pred_check
      _
    $region19: #{tpu_custom_call.1} parent=1 // pred_check_branch
      %21 = sbr.rel (0) target = $region21
    $region20: #{tpu_custom_call.1} parent=1 // pred_region
      _
    $region21: #{tpu_custom_call.1} parent=1 // pred_fallthru
      _
    // Predicated region
    $region22: #{tpu_custom_call.1} parent=1 // pred_check
      _
    $region23: #{tpu_custom_call.1} parent=1 // pred_check_branch
      %23 = sbr.rel (0) target = $region25
    $region24: #{tpu_custom_call.1} parent=1 // pred_region
      _
    $region25: #{tpu_custom_call.1} parent=1 // pred_fallthru
      _
    %v24 = vld [vmem:[%s0] sm:$0xff]
    %v25 = vld [vmem:[%s1] sm:$0xff]
    %v26 = vld [vmem:[%s1 + $0x8] sm:$0xff]
    %v27 = vld [vmem:[%s1 + $0x10] sm:$0xff]
    %v28 = vld [vmem:[%s1 + $0x18] sm:$0xff]
    %v29 = vld [vmem:[%s5] sm:$0x1]
    %v30 = vlaneseq
    %v31 = vshrl.u32 %v30, 7
    %v32 = vsub.s32 0, %v31
    %v33 = vrot.slane %v29, %v32
    %vm34 = vcmask 261120
    %v36 = vsel %vm34, %v24, 0
    %38 = vmatprep.subr.mxu0 0.0
    %39 = vmatpush1.msra.mxu0 0.0
    %40 = vmatprep.subr.mxu0 0.0
    %41 = vmatpush1.msra.mxu0 0.0
    %42 = vmatprep.subr.mxu0 0.0
    %43 = vmatpush1.msra.mxu0 0.0
    %44 = vmatprep.subr.mxu0 0.0
    %45 = vmatpush1.msra.mxu0 0.0
    %46 = vmatprep.subr.mxu0 0.0
    %47 = vmatpush1.msra.mxu0 0.0
    %48 = vmatprep.subr.mxu0 0.0
    %49 = vmatpush1.msra.mxu0 0.0
    %50 = vmatprep.subr.mxu0 0.0
    %51 = vmatpush1.msra.mxu0 0.0
    %52 = vmatprep.subr.mxu0 0.0
    %53 = vmatpush1.msra.mxu0 0.0
    %54 = vmatprep.subr.mxu0 0.0
    %55 = vmatpush1.msra.mxu0 0.0
    %56 = vmatprep.subr.mxu0 0.0
    %57 = vmatpush1.msra.mxu0 0.0
    %58 = vmatprep.subr.mxu0 0.0
    %59 = vmatpush1.msra.mxu0 0.0
    %60 = vmatprep.subr.mxu0 0.0
    %61 = vmatpush1.msra.mxu0 0.0
    %62 = vmatprep.subr.mxu0 0.0
    %63 = vmatpush1.msra.mxu0 %v28
    %64 = vmatprep.subr.mxu0 0.0
    %65 = vmatpush1.msra.mxu0 %v27
    %66 = vmatprep.subr.mxu0 0.0
    %67 = vmatpush1.msra.mxu0 %v26
    %68 = vmatprep.subr.mxu0 0.0
    %69 = vmatpush1.msra.mxu0 %v25
    %70 = vmatprep.subr.mxu0 0.0
    %71 = vmatpush2.msra.mxu0 0.0
    %72 = vmatprep.subr.mxu0 0.0
    %73 = vmatpush2.msra.mxu0 0.0
    %74 = vmatprep.subr.mxu0 0.0
    %75 = vmatpush2.msra.mxu0 0.0
    %76 = vmatprep.subr.mxu0 0.0
    %77 = vmatpush2.msra.mxu0 0.0
    %78 = vmatprep.subr.mxu0 0.0
    %79 = vmatpush2.msra.mxu0 0.0
    %80 = vmatprep.subr.mxu0 0.0
    %81 = vmatpush2.msra.mxu0 0.0
    %82 = vmatprep.subr.mxu0 0.0
    %83 = vmatpush2.msra.mxu0 0.0
    %84 = vmatprep.subr.mxu0 0.0
    %85 = vmatpush2.msra.mxu0 0.0
    %86 = vmatprep.subr.mxu0 0.0
    %87 = vmatpush2.msra.mxu0 0.0
    %88 = vmatprep.subr.mxu0 0.0
    %89 = vmatpush2.msra.mxu0 0.0
    %90 = vmatprep.subr.mxu0 0.0
    %91 = vmatpush2.msra.mxu0 0.0
    %92 = vmatprep.subr.mxu0 0.0
    %93 = vmatpush2.msra.mxu0 0.0
    %94 = vmatprep.subr.mxu0 0.0
    %95 = vmatpush2.msra.mxu0 0.0
    %96 = vmatprep.subr.mxu0 0.0
    %97 = vmatpush2.msra.mxu0 0.0
    %98 = vmatprep.subr.mxu0 0.0
    %99 = vmatpush2.msra.mxu0 0.0
    %100 = vmatprep.subr.mxu0 0.0
    %101 = vmatpush2.msra.mxu0 0.0
    %102 = vmatprep.mubr.f32.mxu0 0.0
    %103 = vmatmul.mubr.f32.gmra.mxu0 %v36
    %v104 = vpop.f32.mrf.mxu0
    %v105 = vadd.f32 %v33, %v104
    %v106 = vpop.f32.mrf.mxu0
    %107 = vdwg.mxu0
    %v108 = vmax.f32 %v105, 0.0
    %v109 = vld [vmem:[%s2] sm:$0xff]
    %v110 = vld [vmem:[%s2 + $0x8] sm:$0xff]
    %v111 = vld [vmem:[%s2 + $0x10] sm:$0xff]
    %v112 = vld [vmem:[%s2 + $0x18] sm:$0xff]
    %v113 = vld [vmem:[%s2 + $0x20] sm:$0xff]
    %v114 = vld [vmem:[%s2 + $0x28] sm:$0xff]
    %v115 = vld [vmem:[%s2 + $0x30] sm:$0xff]
    %v116 = vld [vmem:[%s2 + $0x38] sm:$0xff]
    %v117 = vld [vmem:[%s5 + $0x1] sm:$0x1]
    %v118 = vlaneseq
    %v119 = vshrl.u32 %v118, 7
    %v120 = vsub.s32 0, %v119
    %v121 = vrot.slane %v117, %v120
    %vm122 = vcmask 523264
    %v124 = vsel %vm122, %v108, 0
    %126 = vmatprep.subr.mxu0 0.0
    %127 = vmatpush1.msra.mxu0 0.0
    %128 = vmatprep.subr.mxu0 0.0
    %129 = vmatpush1.msra.mxu0 0.0
    %130 = vmatprep.subr.mxu0 0.0
    %131 = vmatpush1.msra.mxu0 0.0
    %132 = vmatprep.subr.mxu0 0.0
    %133 = vmatpush1.msra.mxu0 0.0
    %134 = vmatprep.subr.mxu0 0.0
    %135 = vmatpush1.msra.mxu0 0.0
    %136 = vmatprep.subr.mxu0 0.0
    %137 = vmatpush1.msra.mxu0 0.0
    %138 = vmatprep.subr.mxu0 0.0
    %139 = vmatpush1.msra.mxu0 0.0
    %140 = vmatprep.subr.mxu0 0.0
    %141 = vmatpush1.msra.mxu0 0.0
    %142 = vmatprep.subr.mxu0 0.0
    %143 = vmatpush1.msra.mxu0 %v116
    %144 = vmatprep.subr.mxu0 0.0
    %145 = vmatpush1.msra.mxu0 %v115
    %146 = vmatprep.subr.mxu0 0.0
    %147 = vmatpush1.msra.mxu0 %v114
    %148 = vmatprep.subr.mxu0 0.0
    %149 = vmatpush1.msra.mxu0 %v113
    %150 = vmatprep.subr.mxu0 0.0
    %151 = vmatpush1.msra.mxu0 %v112
    %152 = vmatprep.subr.mxu0 0.0
    %153 = vmatpush1.msra.mxu0 %v111
    %154 = vmatprep.subr.mxu0 0.0
    %155 = vmatpush1.msra.mxu0 %v110
    %156 = vmatprep.subr.mxu0 0.0
    %157 = vmatpush1.msra.mxu0 %v109
    %158 = vmatprep.subr.mxu0 0.0
    %159 = vmatpush2.msra.mxu0 0.0
    %160 = vmatprep.subr.mxu0 0.0
    %161 = vmatpush2.msra.mxu0 0.0
    %162 = vmatprep.subr.mxu0 0.0
    %163 = vmatpush2.msra.mxu0 0.0
    %164 = vmatprep.subr.mxu0 0.0
    %165 = vmatpush2.msra.mxu0 0.0
    %166 = vmatprep.subr.mxu0 0.0
    %167 = vmatpush2.msra.mxu0 0.0
    %168 = vmatprep.subr.mxu0 0.0
    %169 = vmatpush2.msra.mxu0 0.0
    %170 = vmatprep.subr.mxu0 0.0
    %171 = vmatpush2.msra.mxu0 0.0
    %172 = vmatprep.subr.mxu0 0.0
    %173 = vmatpush2.msra.mxu0 0.0
    %174 = vmatprep.subr.mxu0 0.0
    %175 = vmatpush2.msra.mxu0 0.0
    %176 = vmatprep.subr.mxu0 0.0
    %177 = vmatpush2.msra.mxu0 0.0
    %178 = vmatprep.subr.mxu0 0.0
    %179 = vmatpush2.msra.mxu0 0.0
    %180 = vmatprep.subr.mxu0 0.0
    %181 = vmatpush2.msra.mxu0 0.0
    %182 = vmatprep.subr.mxu0 0.0
    %183 = vmatpush2.msra.mxu0 0.0
    %184 = vmatprep.subr.mxu0 0.0
    %185 = vmatpush2.msra.mxu0 0.0
    %186 = vmatprep.subr.mxu0 0.0
    %187 = vmatpush2.msra.mxu0 0.0
    %188 = vmatprep.subr.mxu0 0.0
    %189 = vmatpush2.msra.mxu0 0.0
    %190 = vmatprep.mubr.f32.mxu0 0.0
    %191 = vmatmul.mubr.f32.gmra.mxu0 %v124
    %v192 = vpop.f32.mrf.mxu0
    %v193 = vadd.f32 %v121, %v192
    %v194 = vpop.f32.mrf.mxu0
    %195 = vdwg.mxu0
    %v196 = vmax.f32 %v193, 0.0
    %v197 = vld [vmem:[%s3] sm:$0xff]
    %v198 = vld [vmem:[%s3 + $0x8] sm:$0xff]
    %v199 = vld [vmem:[%s3 + $0x10] sm:$0xff]
    %v200 = vld [vmem:[%s3 + $0x18] sm:$0xff]
    %v201 = vld [vmem:[%s3 + $0x20] sm:$0xff]
    %v202 = vld [vmem:[%s3 + $0x28] sm:$0xff]
    %v203 = vld [vmem:[%s3 + $0x30] sm:$0xff]
    %v204 = vld [vmem:[%s3 + $0x38] sm:$0xff]
    %v205 = vld [vmem:[%s5 + $0x2] sm:$0x1]
    %v206 = vlaneseq
    %v207 = vshrl.u32 %v206, 7
    %v208 = vsub.s32 0, %v207
    %v209 = vrot.slane %v205, %v208
    %v211 = vsel %vm122, %v196, 0
    %213 = vmatprep.subr.mxu0 0.0
    %214 = vmatpush1.msra.mxu0 0.0
    %215 = vmatprep.subr.mxu0 0.0
    %216 = vmatpush1.msra.mxu0 0.0
    %217 = vmatprep.subr.mxu0 0.0
    %218 = vmatpush1.msra.mxu0 0.0
    %219 = vmatprep.subr.mxu0 0.0
    %220 = vmatpush1.msra.mxu0 0.0
    %221 = vmatprep.subr.mxu0 0.0
    %222 = vmatpush1.msra.mxu0 0.0
    %223 = vmatprep.subr.mxu0 0.0
    %224 = vmatpush1.msra.mxu0 0.0
    %225 = vmatprep.subr.mxu0 0.0
    %226 = vmatpush1.msra.mxu0 0.0
    %227 = vmatprep.subr.mxu0 0.0
    %228 = vmatpush1.msra.mxu0 0.0
    %229 = vmatprep.subr.mxu0 0.0
    %230 = vmatpush1.msra.mxu0 %v204
    %231 = vmatprep.subr.mxu0 0.0
    %232 = vmatpush1.msra.mxu0 %v203
    %233 = vmatprep.subr.mxu0 0.0
    %234 = vmatpush1.msra.mxu0 %v202
    %235 = vmatprep.subr.mxu0 0.0
    %236 = vmatpush1.msra.mxu0 %v201
    %237 = vmatprep.subr.mxu0 0.0
    %238 = vmatpush1.msra.mxu0 %v200
    %239 = vmatprep.subr.mxu0 0.0
    %240 = vmatpush1.msra.mxu0 %v199
    %241 = vmatprep.subr.mxu0 0.0
    %242 = vmatpush1.msra.mxu0 %v198
    %243 = vmatprep.subr.mxu0 0.0
    %244 = vmatpush1.msra.mxu0 %v197
    %245 = vmatprep.subr.mxu0 0.0
    %246 = vmatpush2.msra.mxu0 0.0
    %247 = vmatprep.subr.mxu0 0.0
    %248 = vmatpush2.msra.mxu0 0.0
    %249 = vmatprep.subr.mxu0 0.0
    %250 = vmatpush2.msra.mxu0 0.0
    %251 = vmatprep.subr.mxu0 0.0
    %252 = vmatpush2.msra.mxu0 0.0
    %253 = vmatprep.subr.mxu0 0.0
    %254 = vmatpush2.msra.mxu0 0.0
    %255 = vmatprep.subr.mxu0 0.0
    %256 = vmatpush2.msra.mxu0 0.0
    %257 = vmatprep.subr.mxu0 0.0
    %258 = vmatpush2.msra.mxu0 0.0
    %259 = vmatprep.subr.mxu0 0.0
    %260 = vmatpush2.msra.mxu0 0.0
    %261 = vmatprep.subr.mxu0 0.0
    %262 = vmatpush2.msra.mxu0 0.0
    %263 = vmatprep.subr.mxu0 0.0
    %264 = vmatpush2.msra.mxu0 0.0
    %265 = vmatprep.subr.mxu0 0.0
    %266 = vmatpush2.msra.mxu0 0.0
    %267 = vmatprep.subr.mxu0 0.0
    %268 = vmatpush2.msra.mxu0 0.0
    %269 = vmatprep.subr.mxu0 0.0
    %270 = vmatpush2.msra.mxu0 0.0
    %271 = vmatprep.subr.mxu0 0.0
    %272 = vmatpush2.msra.mxu0 0.0
    %273 = vmatprep.subr.mxu0 0.0
    %274 = vmatpush2.msra.mxu0 0.0
    %275 = vmatprep.subr.mxu0 0.0
    %276 = vmatpush2.msra.mxu0 0.0
    %277 = vmatprep.mubr.f32.mxu0 0.0
    %278 = vmatmul.mubr.f32.gmra.mxu0 %v211
    %v279 = vpop.f32.mrf.mxu0
    %v280 = vadd.f32 %v209, %v279
    %v281 = vpop.f32.mrf.mxu0
    %282 = vdwg.mxu0
    %v283 = vmax.f32 %v280, 0.0
    %v284 = vld [vmem:[%s4] sm:$0xff]
    %v285 = vld [vmem:[%s4 + $0x8] sm:$0xff]
    %v286 = vld [vmem:[%s4 + $0x10] sm:$0xff]
    %v287 = vld [vmem:[%s4 + $0x18] sm:$0xff]
    %v288 = vld [vmem:[%s4 + $0x20] sm:$0xff]
    %v289 = vld [vmem:[%s4 + $0x28] sm:$0xff]
    %v290 = vld [vmem:[%s5 + $0x3] sm:$0x1]
    %v291 = vlaneseq
    %v292 = vshrl.u32 %v291, 7
    %v293 = vsub.s32 0, %v292
    %v294 = vrot.slane %v290, %v293
    %vm295 = vcmask 392192
    %v297 = vsel %vm295, %v283, 0
    %299 = vmatprep.subr.mxu0 0.0
    %300 = vmatpush1.msra.mxu0 0.0
    %301 = vmatprep.subr.mxu0 0.0
    %302 = vmatpush1.msra.mxu0 0.0
    %303 = vmatprep.subr.mxu0 0.0
    %304 = vmatpush1.msra.mxu0 0.0
    %305 = vmatprep.subr.mxu0 0.0
    %306 = vmatpush1.msra.mxu0 0.0
    %307 = vmatprep.subr.mxu0 0.0
    %308 = vmatpush1.msra.mxu0 0.0
    %309 = vmatprep.subr.mxu0 0.0
    %310 = vmatpush1.msra.mxu0 0.0
    %311 = vmatprep.subr.mxu0 0.0
    %312 = vmatpush1.msra.mxu0 0.0
    %313 = vmatprep.subr.mxu0 0.0
    %314 = vmatpush1.msra.mxu0 0.0
    %315 = vmatprep.subr.mxu0 0.0
    %316 = vmatpush1.msra.mxu0 0.0
    %317 = vmatprep.subr.mxu0 0.0
    %318 = vmatpush1.msra.mxu0 0.0
    %319 = vmatprep.subr.mxu0 0.0
    %320 = vmatpush1.msra.mxu0 %v289
    %321 = vmatprep.subr.mxu0 0.0
    %322 = vmatpush1.msra.mxu0 %v288
    %323 = vmatprep.subr.mxu0 0.0
    %324 = vmatpush1.msra.mxu0 %v287
    %325 = vmatprep.subr.mxu0 0.0
    %326 = vmatpush1.msra.mxu0 %v286
    %327 = vmatprep.subr.mxu0 0.0
    %328 = vmatpush1.msra.mxu0 %v285
    %329 = vmatprep.subr.mxu0 0.0
    %330 = vmatpush1.msra.mxu0 %v284
    %331 = vmatprep.subr.mxu0 0.0
    %332 = vmatpush2.msra.mxu0 0.0
    %333 = vmatprep.subr.mxu0 0.0
    %334 = vmatpush2.msra.mxu0 0.0
    %335 = vmatprep.subr.mxu0 0.0
    %336 = vmatpush2.msra.mxu0 0.0
    %337 = vmatprep.subr.mxu0 0.0
    %338 = vmatpush2.msra.mxu0 0.0
    %339 = vmatprep.subr.mxu0 0.0
    %340 = vmatpush2.msra.mxu0 0.0
    %341 = vmatprep.subr.mxu0 0.0
    %342 = vmatpush2.msra.mxu0 0.0
    %343 = vmatprep.subr.mxu0 0.0
    %344 = vmatpush2.msra.mxu0 0.0
    %345 = vmatprep.subr.mxu0 0.0
    %346 = vmatpush2.msra.mxu0 0.0
    %347 = vmatprep.subr.mxu0 0.0
    %348 = vmatpush2.msra.mxu0 0.0
    %349 = vmatprep.subr.mxu0 0.0
    %350 = vmatpush2.msra.mxu0 0.0
    %351 = vmatprep.subr.mxu0 0.0
    %352 = vmatpush2.msra.mxu0 0.0
    %353 = vmatprep.subr.mxu0 0.0
    %354 = vmatpush2.msra.mxu0 0.0
    %355 = vmatprep.subr.mxu0 0.0
    %356 = vmatpush2.msra.mxu0 0.0
    %357 = vmatprep.subr.mxu0 0.0
    %358 = vmatpush2.msra.mxu0 0.0
    %359 = vmatprep.subr.mxu0 0.0
    %360 = vmatpush2.msra.mxu0 0.0
    %361 = vmatprep.subr.mxu0 0.0
    %362 = vmatpush2.msra.mxu0 0.0
    %363 = vmatprep.mubr.f32.mxu0 0.0
    %364 = vmatmul.mubr.f32.gmra.mxu0 %v297
    %v365 = vpop.f32.mrf.mxu0
    %v366 = vadd.f32 %v294, %v365
    %v367 = vpop.f32.mrf.mxu0
    %368 = vdwg.mxu0
    %v369 = vlaneseq
    %v370 = vand.u32 %v369, 127
    %v371 = vmax.f32 %v366, -20.0
    %v372 = vmin.f32 %v371, 2.0
    %vm373 = vcmp.ge.s32.totalorder %v370, 4
    %v374 = vsel %vm373, %v372, %v366
    %vm375 = vcmask 64512
    %376 = vst.msk [vmem:[#allocation2] sm:$0xff] %vm375, %v374
    // Predicated region
    $region26: #{tpu_custom_call.1} parent=1 // pred_check
      _
    $region27: #{tpu_custom_call.1} parent=1 // pred_check_branch
      %378 = sbr.rel (0) target = $region29
    $region28: #{tpu_custom_call.1} parent=1 // pred_region
      %s380 = ssub.s32 128, 128
      %381 = vsyncadd [#allocation3], %s380
      %s383 = sshll.u32 [#allocation2], 4
      %s384 = int_to_ptr.vmem [resolvable:$true] %s383
      %386 = dma.vmem_to_hbm [thread:$0]  %s384, 128, %s6, [#allocation3]
    $region29: #{tpu_custom_call.1} parent=1 // pred_fallthru
      _
    // Predicated region
    $region30: #{tpu_custom_call.1} parent=1 // pred_check
      _
    $region31: #{tpu_custom_call.1} parent=1 // pred_check_branch
      %388 = sbr.rel (0) target = $region33
    $region32: #{tpu_custom_call.1} parent=1 // pred_region
      %389 = dma.done [#allocation3], 128
    $region33: #{tpu_custom_call.1} parent=1 // pred_fallthru
      _
    %390 = vsyncpa [#allocation3], 1

</llo_original>
